<compile_context>
chip_gen: v5e
topology: v5e:2x2
jax: 0.10.0
libtpu: 0.0.40
codegen_flags: <defaults>
</compile_context>

<pallas_src>
import functools

import jax
import jax.numpy as jnp
from jax import lax
from jax.experimental import pallas as pl
from jax.experimental.pallas import tpu as pltpu

BN_EPS = 1e-5


def _fixed_op_kernel(x_ref, o_ref, *, W):
    """x_ref: (N, Cb, H*W) input block (lane axis = H*W, dense).
       o_ref: (N, Cb, H*W) output block = BN(maxpool3x3_s1_p1(x))."""
    n, cb, hw = x_ref.shape
    x = x_ref[...].astype(jnp.float32)          # in-kernel upcast (bf16 stays bf16 in HBM)
    neg = jnp.float32(-jnp.inf)

    # --- border masks, hoisted to (1, 1, HW); broadcast inside the selects ---
    lane = lax.broadcasted_iota(jnp.int32, (1, 1, hw), dimension=2)
    col = (lane & (W - 1)) if (W & (W - 1)) == 0 else (lane % W)
    m_left = col == 0                 # column 0 has no left neighbour
    m_right = col == W - 1            # column W-1 has no right neighbour
    m_up = lane < W                   # first image row
    m_down = lane >= hw - W           # last image row

    # Lane shifts on the XLU (vrot).  Positive shifts only: wrapped lanes are
    # masked above, and roll(v, hw - k) == roll(v, -k) for the full axis.
    if hw % 128 == 0:
        shift = lambda v, s: pltpu.roll(v, s, axis=2)
    else:
        shift = lambda v, s: jnp.roll(v, s, axis=2)

    # --- MaxPool2d(3, stride=1, padding=1), separable -------------------------
    left = jnp.where(m_left, neg, shift(x, 1))
    right = jnp.where(m_right, neg, shift(x, hw - 1))
    rmax = jnp.maximum(x, jnp.maximum(left, right))
    up = jnp.where(m_up, neg, shift(rmax, W))
    down = jnp.where(m_down, neg, shift(rmax, hw - W))
    pooled = jnp.maximum(rmax, jnp.maximum(up, down))

    # Stage pooled through o_ref: drops a full-block live temporary, and is
    # exact even for bf16 outputs (pooled values are input elements).
    o_ref[...] = pooled.astype(o_ref.dtype)

    # --- BatchNorm2d(C, affine=False), training-mode batch stats --------------
    # Two-pass variance (mean, then centered sum of squares) in f32; avoids the
    # E[x^2] - mean^2 cancellation of the previous one-pass form.
    cnt = jnp.float32(n * hw)
    p = o_ref[...].astype(jnp.float32)
    mean = jnp.sum(p, axis=(0, 2), keepdims=True) / cnt          # (1, Cb, 1)
    d = p - mean
    var = jnp.sum(d * d, axis=(0, 2), keepdims=True) / cnt       # biased var
    inv = lax.rsqrt(var + BN_EPS)                                # EUP slot
    o_ref[...] = (d * inv).astype(o_ref.dtype)


def _pick_c_block(N, C, HW, itemsize=4, target_block_bytes=4 << 20,
                  hard_cap_bytes=8 << 20):
    """Channel block Cb: C % Cb == 0 and (Cb == C or Cb % 8 == 0) (the (8,128)
    constraint on the block's second-minor dim).  Picks the largest block under
    ~4 MiB (double-buffered in+out = 4 blocks <= 16 MiB, inside the raised
    vmem_limit on v5e/v6e/v7x), then prefers a >= 2-step grid so v7x's two
    TensorCores both get work, and hard-caps the block size instead of letting
    an oversized fallback compile and blow v7x's 64 MiB VMEM."""
    legal = [cb for cb in range(1, C + 1)
             if C % cb == 0 and (cb == C or cb % 8 == 0)]
    fitting = [cb for cb in legal
               if N * cb * HW * itemsize <= target_block_bytes]
    cb = max(fitting) if fitting else min(legal)
    if C // cb == 1:
        smaller = [c for c in legal
                   if c < cb and N * c * HW * itemsize <= target_block_bytes]
        if smaller:
            cb = max(smaller)    # split the grid across TensorCores (v7x)
    if N * cb * HW * itemsize > hard_cap_bytes:
        # TODO(synk): add a multi-pass-stats fallback with an N/HW grid axis
        # for shapes whose smallest legal channel block exceeds the budget.
        raise ValueError(
            f"FixedOp Pallas kernel: smallest legal channel block ({cb} ch, "
            f"{N * cb * HW * itemsize} bytes) exceeds the VMEM budget for "
            f"shape (N={N}, C={C}, HW={HW}); needs a multi-pass kernel.")
    return cb


def fixed_op_forward(x):
    """x: (N, C, H, W) NCHW. Returns BatchNorm2d(affine=False)(MaxPool2d(3,1,1)(x))."""
    N, C, H, W = x.shape
    HW = H * W
    x3 = x.reshape(N, C, HW)                 # free view of contiguous NCHW; no dtype pass

    Cb = _pick_c_block(N, C, HW, itemsize=x.dtype.itemsize)
    grid = (C // Cb,)

    kernel = functools.partial(_fixed_op_kernel, W=W)
    y3 = pl.pallas_call(
        kernel,
        out_shape=jax.ShapeDtypeStruct((N, C, HW), x.dtype),
        grid_spec=pltpu.PrefetchScalarGridSpec(
            num_scalar_prefetch=0,
            grid=grid,
            in_specs=[pl.BlockSpec((N, Cb, HW), lambda c: (0, c, 0))],
            out_specs=pl.BlockSpec((N, Cb, HW), lambda c: (0, c, 0)),
        ),
        compiler_params=pltpu.CompilerParams(
            # Channel blocks are fully independent (per-channel BN stats).
            dimension_semantics=("parallel",),
            # Explicit scoped-VMEM budget: 4 MiB blocks x (2 in + 2 out)
            # buffers = 16 MiB, comfortably inside 48 MiB on v5e/v6e/v7x.
            vmem_limit_bytes=48 * 1024 * 1024,
        ),
    )(x3)
    return y3.reshape(N, C, H, W)


def _reference(x):
    """Independent pure-JAX reference (reduce_window + two-pass BN)."""
    pooled = lax.reduce_window(
        x, -jnp.inf, lax.max,
        window_dimensions=(1, 1, 3, 3),
        window_strides=(1, 1, 1, 1),
        padding=((0, 0), (0, 0), (1, 1), (1, 1)))
    mean = jnp.mean(pooled, axis=(0, 2, 3), keepdims=True)
    var = jnp.mean(jnp.square(pooled - mean), axis=(0, 2, 3), keepdims=True)
    return (pooled - mean) * lax.rsqrt(var + BN_EPS)


if __name__ == "__main__":
    key = jax.random.PRNGKey(0)
    N, C, H, W = 2, 4, 16, 16  # FixedOp(C=4, stride=1, fixed_op -> 'max_pool_3x3')
    x = jax.random.normal(key, (N, C, H, W), dtype=jnp.float32)

    y = fixed_op_forward(x)
    y = jax.block_until_ready(y)

    y_ref = _reference(x)
    assert y.shape == (N, C, H, W)
    assert jnp.allclose(y, y_ref, atol=1e-4, rtol=1e-4), "mismatch vs reference"
    print("KERNEL_OK")
</pallas_src>

<mosaic_0001>
module attributes {stable_mosaic.version = 11 : i64} {
  func.func @_fixed_op_kernel(%arg0: i32, %arg1: memref<2x4x256xf32, #tpu.memory_space<vmem>>, %arg2: memref<2x4x256xf32, #tpu.memory_space<vmem>>) attributes {dimension_semantics = [#tpu.dimension_semantics<parallel>], iteration_bounds = array<i64: 1>, scalar_prefetch = 0 : i64, scratch_operands = 0 : i64, tpu.core_type = #tpu.core_type<tc>, window_params = [{transform_indices = @transform_0, window_bounds = array<i64: 2, 4, 256>}, {transform_indices = @transform_1, window_bounds = array<i64: 2, 4, 256>}]} {
    %c0 = arith.constant 0 : index
    %c0_0 = arith.constant 0 : index
    %c0_1 = arith.constant 0 : index
    %0 = vector.load %arg1[%c0, %c0_0, %c0_1] : memref<2x4x256xf32, #tpu.memory_space<vmem>>, vector<2x4x256xf32>
    %1 = tpu.iota {dimensions = array<i32: 2>} : vector<1x1x256xi32>
    %c15_i32 = arith.constant 15 : i32
    %2 = vector.broadcast %c15_i32 : i32 to vector<1x1x256xi32>
    %3 = arith.andi %1, %2 : vector<1x1x256xi32>
    %c0_i32 = arith.constant 0 : i32
    %4 = vector.broadcast %c0_i32 : i32 to vector<1x1x256xi32>
    %5 = arith.cmpi eq, %3, %4 : vector<1x1x256xi32>
    %c15_i32_2 = arith.constant 15 : i32
    %6 = vector.broadcast %c15_i32_2 : i32 to vector<1x1x256xi32>
    %7 = arith.cmpi eq, %3, %6 : vector<1x1x256xi32>
    %c16_i32 = arith.constant 16 : i32
    %8 = vector.broadcast %c16_i32 : i32 to vector<1x1x256xi32>
    %9 = arith.cmpi slt, %1, %8 : vector<1x1x256xi32>
    %c240_i32 = arith.constant 240 : i32
    %10 = vector.broadcast %c240_i32 : i32 to vector<1x1x256xi32>
    %11 = arith.cmpi sge, %1, %10 : vector<1x1x256xi32>
    %c1_i32 = arith.constant 1 : i32
    %12 = tpu.dynamic_rotate %0 by %c1_i32 dim 2 : vector<2x4x256xf32>, i32 -> vector<2x4x256xf32>
    %cst = arith.constant 0xFF800000 : f32
    %13 = vector.shape_cast %5 : vector<1x1x256xi1> to vector<1x1x256xi1>
    %14 = vector.broadcast %13 : vector<1x1x256xi1> to vector<2x4x256xi1>
    %15 = vector.broadcast %cst : f32 to vector<2x4x256xf32>
    %16 = arith.select %14, %15, %12 : vector<2x4x256xi1>, vector<2x4x256xf32>
    %c255_i32 = arith.constant 255 : i32
    %17 = tpu.dynamic_rotate %0 by %c255_i32 dim 2 : vector<2x4x256xf32>, i32 -> vector<2x4x256xf32>
    %cst_3 = arith.constant 0xFF800000 : f32
    %18 = vector.shape_cast %7 : vector<1x1x256xi1> to vector<1x1x256xi1>
    %19 = vector.broadcast %18 : vector<1x1x256xi1> to vector<2x4x256xi1>
    %20 = vector.broadcast %cst_3 : f32 to vector<2x4x256xf32>
    %21 = arith.select %19, %20, %17 : vector<2x4x256xi1>, vector<2x4x256xf32>
    %22 = arith.maximumf %16, %21 : vector<2x4x256xf32>
    %23 = arith.maximumf %0, %22 : vector<2x4x256xf32>
    %c16_i32_4 = arith.constant 16 : i32
    %24 = tpu.dynamic_rotate %23 by %c16_i32_4 dim 2 : vector<2x4x256xf32>, i32 -> vector<2x4x256xf32>
    %cst_5 = arith.constant 0xFF800000 : f32
    %25 = vector.shape_cast %9 : vector<1x1x256xi1> to vector<1x1x256xi1>
    %26 = vector.broadcast %25 : vector<1x1x256xi1> to vector<2x4x256xi1>
    %27 = vector.broadcast %cst_5 : f32 to vector<2x4x256xf32>
    %28 = arith.select %26, %27, %24 : vector<2x4x256xi1>, vector<2x4x256xf32>
    %c240_i32_6 = arith.constant 240 : i32
    %29 = tpu.dynamic_rotate %23 by %c240_i32_6 dim 2 : vector<2x4x256xf32>, i32 -> vector<2x4x256xf32>
    %cst_7 = arith.constant 0xFF800000 : f32
    %30 = vector.shape_cast %11 : vector<1x1x256xi1> to vector<1x1x256xi1>
    %31 = vector.broadcast %30 : vector<1x1x256xi1> to vector<2x4x256xi1>
    %32 = vector.broadcast %cst_7 : f32 to vector<2x4x256xf32>
    %33 = arith.select %31, %32, %29 : vector<2x4x256xi1>, vector<2x4x256xf32>
    %34 = arith.maximumf %28, %33 : vector<2x4x256xf32>
    %35 = arith.maximumf %23, %34 : vector<2x4x256xf32>
    %c0_8 = arith.constant 0 : index
    %c0_9 = arith.constant 0 : index
    %c0_10 = arith.constant 0 : index
    %36 = vector.load %arg2[%c0_8, %c0_9, %c0_10] : memref<2x4x256xf32, #tpu.memory_space<vmem>>, vector<2x4x256xf32>
    tpu.vector_store %arg2[%c0_8, %c0_9, %c0_10], %35 {strides = array<i32>} : memref<2x4x256xf32, #tpu.memory_space<vmem>>, vector<2x4x256xf32>,
    %c0_11 = arith.constant 0 : index
    %c0_12 = arith.constant 0 : index
    %c0_13 = arith.constant 0 : index
    %37 = vector.load %arg2[%c0_11, %c0_12, %c0_13] : memref<2x4x256xf32, #tpu.memory_space<vmem>>, vector<2x4x256xf32>
    %cst_14 = arith.constant dense<0.000000e+00> : vector<4xf32>
    %38 = vector.multi_reduction <add>, %37, %cst_14 [0, 2] : vector<2x4x256xf32> to vector<4xf32>
    %39 = vector.shape_cast %38 : vector<4xf32> to vector<1x4x1xf32>
    %cst_15 = arith.constant 5.120000e+02 : f32
    %40 = vector.broadcast %cst_15 : f32 to vector<1x4x1xf32>
    %41 = arith.divf %39, %40 : vector<1x4x1xf32>
    %42 = vector.broadcast %41 : vector<1x4x1xf32> to vector<2x4x256xf32>
    %43 = arith.subf %37, %42 : vector<2x4x256xf32>
    %44 = arith.mulf %43, %43 : vector<2x4x256xf32>
    %cst_16 = arith.constant dense<0.000000e+00> : vector<4xf32>
    %45 = vector.multi_reduction <add>, %44, %cst_16 [0, 2] : vector<2x4x256xf32> to vector<4xf32>
    %46 = vector.shape_cast %45 : vector<4xf32> to vector<1x4x1xf32>
    %cst_17 = arith.constant 5.120000e+02 : f32
    %47 = vector.broadcast %cst_17 : f32 to vector<1x4x1xf32>
    %48 = arith.divf %46, %47 : vector<1x4x1xf32>
    %cst_18 = arith.constant 9.99999974E-6 : f32
    %49 = vector.broadcast %cst_18 : f32 to vector<1x4x1xf32>
    %50 = arith.addf %48, %49 : vector<1x4x1xf32>
    %51 = math.rsqrt %50 : vector<1x4x1xf32>
    %52 = vector.broadcast %51 : vector<1x4x1xf32> to vector<2x4x256xf32>
    %53 = arith.mulf %43, %52 : vector<2x4x256xf32>
    %c0_19 = arith.constant 0 : index
    %c0_20 = arith.constant 0 : index
    %c0_21 = arith.constant 0 : index
    %54 = vector.load %arg2[%c0_19, %c0_20, %c0_21] : memref<2x4x256xf32, #tpu.memory_space<vmem>>, vector<2x4x256xf32>
    tpu.vector_store %arg2[%c0_19, %c0_20, %c0_21], %53 {strides = array<i32>} : memref<2x4x256xf32, #tpu.memory_space<vmem>>, vector<2x4x256xf32>,
    return
  }
  func.func @transform_0(%arg0: i32) -> (i32, i32, i32) {
    %c0_i32 = arith.constant 0 : i32
    %c0_i32_0 = arith.constant 0 : i32
    %c0_i32_1 = arith.constant 0 : i32
    return %c0_i32, %arg0, %c0_i32_0 : i32, i32, i32
  }
  func.func @transform_1(%arg0: i32) -> (i32, i32, i32) {
    %c0_i32 = arith.constant 0 : i32
    %c0_i32_0 = arith.constant 0 : i32
    %c0_i32_1 = arith.constant 0 : i32
    return %c0_i32, %arg0, %c0_i32_0 : i32, i32, i32
  }
}

</mosaic_0001>

<llo_original>
// kernel: tpu_custom_call.1
$region0: #{tpu_custom_call.1}
  #allocation0 [shape = 'u32[]', space=smem, size = 0x4, offset = 0x4, fixed_abs, tag = 'smem constant byte address 0x4 - core index']
  #allocation1 [shape = 'u32[72,128]{1,0:T(1,128)}', space=vmem, size = 0x9000, scoped, tag = 'internal scratch']
  %s0 = inlined_call_operand.hbm [shape: f32[2,4,256], index: 0, kind: input, shape index: {}]
  %s1 = inlined_call_operand.hbm [shape: f32[2,4,256], index: 1, kind: output, shape index: {}]
  %s2 = sld [smem:[#allocation0]]
  $region18: #{tpu_custom_call.1} parent=0
    _
  %s4 = ssub.s32 1, %s2
  %s5 = scalar_select 0, %s4, %s2
  $region1: #{tpu_custom_call.1} parent=0
    #allocation2 [shape = 'u8[8192]{0}', space=vmem, size = 0x2000, scoped, tag = 'input window, operand 0, single buffered']
    #allocation3 [shape = 's32[1]{0}', space=sflag, size = 0x4, scoped, tag = 'scoped memory for tpu_custom_call.1']
    #allocation4 [shape = 's32[1]{0}', space=sflag, size = 0x4, scoped, tag = 'scoped memory for tpu_custom_call.1']
    #allocation5 [shape = 'u8[8192]{0}', space=vmem, size = 0x2000, scoped, tag = 'output window, operand 0, single buffered']
    %6 = vsyncpa [#allocation3], 0
    %7 = vsyncpa [#allocation4], 0
    // Predicated region
    $region2: #{tpu_custom_call.1} parent=1 // pred_check
      _
    $region3: #{tpu_custom_call.1} parent=1 // pred_check_branch
      %9 = sbr.rel (0) target = $region5
    $region4: #{tpu_custom_call.1} parent=1 // pred_region
      %11 = vsyncadd [#allocation3], 0
      %s12 = sshll.u32 %s0, 4
      %s13 = int_to_ptr.hbm [resolvable:$true] %s12
      %s14 = sshll.u32 [#allocation2], 4
      %s15 = int_to_ptr.vmem [resolvable:$true] %s14
      %20 = dma.hbm_to_vmem [thread:$0]  %s13, 256, %s15, [#allocation3], 128, 128, 8
    $region5: #{tpu_custom_call.1} parent=1 // pred_fallthru
      _
    // Predicated region
    $region6: #{tpu_custom_call.1} parent=1 // pred_check
      _
    $region7: #{tpu_custom_call.1} parent=1 // pred_check_branch
      %22 = sbr.rel (0) target = $region9
    $region8: #{tpu_custom_call.1} parent=1 // pred_region
      %24 = dma.done [#allocation3], 256
    $region9: #{tpu_custom_call.1} parent=1 // pred_fallthru
      _
    %v25 = vld [vmem:[#allocation2] sm:$0xff]
    %v26 = vld [vmem:[#allocation2 + $0x8] sm:$0xff]
    %v27 = vlaneseq
    %v28 = vand.u32 %v27, 127
    %v29 = vadd.s32 %v28, 128
    %v30 = vand.u32 %v28, 15
    %v31 = vand.u32 %v29, 15
    %vm32 = vcmp.eq.s32.totalorder %v30, 0
    %vm33 = vcmp.eq.s32.totalorder %v31, 0
    %vm34 = vcmp.eq.s32.totalorder %v30, 15
    %vm35 = vcmp.eq.s32.totalorder %v31, 15
    %vm36 = vcmp.lt.s32.totalorder %v28, 16
    %vm37 = vcmp.lt.s32.totalorder %v29, 16
    %vm38 = vcmp.ge.s32.totalorder %v28, 240
    %vm39 = vcmp.ge.s32.totalorder %v29, 240
    %42 = vst [vmem:[#allocation1] ss:$2 sm:$0xff] %v25
    %v43 = vld.sshfl [vmem:[#allocation1] sm:$0xff pattern:$0x75316420]
    %v44 = vld.sshfl [vmem:[#allocation1 + $0x8] sm:$0xff pattern:$0x75316420]
    %s45 = scalar_lea.vmem [#allocation1], 16
    %46 = vst [vmem:[%s45] ss:$2 sm:$0xff] %v26
    %v47 = vld.sshfl [vmem:[#allocation1 + $0x10] sm:$0xff pattern:$0x75316420]
    %v48 = vld.sshfl [vmem:[#allocation1 + $0x18] sm:$0xff pattern:$0x75316420]
    %53 = vrot.lane.b32.xlu0 %v43, 1
    %v54 = vpop.permute.xlu0 %53
    %55 = vrot.lane.b32.xlu0 %v47, 1
    %v56 = vpop.permute.xlu0 %55
    %57 = vrot.lane.b32.xlu0 %v44, 1
    %v58 = vpop.permute.xlu0 %57
    %59 = vrot.lane.b32.xlu0 %v48, 1
    %v60 = vpop.permute.xlu0 %59
    %vm61 = vcmp.lt.s32.totalorder %v28, 1
    %v62 = vsel %vm61, %v54, %v58
    %v63 = vsel %vm61, %v56, %v60
    %v64 = vsel %vm61, %v58, %v54
    %v65 = vsel %vm61, %v60, %v56
    %v66 = vsel %vm32, 1, 0
    %v67 = vsel %vm33, 1, 0
    %vm68 = vcmp.eq.s32.totalorder %v66, 1
    %vm69 = vcmp.eq.s32.totalorder %v67, 1
    %v70 = vsel %vm68, -inf, %v64
    %v71 = vsel %vm69, -inf, %v62
    %v72 = vsel %vm68, -inf, %v65
    %v73 = vsel %vm69, -inf, %v63
    %74 = vst [vmem:[#allocation1] ss:$2 sm:$0xff] %v25
    %v75 = vld.sshfl [vmem:[#allocation1] sm:$0xff pattern:$0x75316420]
    %v76 = vld.sshfl [vmem:[#allocation1 + $0x8] sm:$0xff pattern:$0x75316420]
    %s77 = scalar_lea.vmem [#allocation1], 16
    %78 = vst [vmem:[%s77] ss:$2 sm:$0xff] %v26
    %v79 = vld.sshfl [vmem:[#allocation1 + $0x10] sm:$0xff pattern:$0x75316420]
    %v80 = vld.sshfl [vmem:[#allocation1 + $0x18] sm:$0xff pattern:$0x75316420]
    %85 = vrot.lane.b32.xlu0 %v75, 127
    %v86 = vpop.permute.xlu0 %85
    %87 = vrot.lane.b32.xlu0 %v79, 127
    %v88 = vpop.permute.xlu0 %87
    %89 = vrot.lane.b32.xlu0 %v76, 127
    %v90 = vpop.permute.xlu0 %89
    %91 = vrot.lane.b32.xlu0 %v80, 127
    %v92 = vpop.permute.xlu0 %91
    %vm93 = vcmp.lt.s32.totalorder %v28, 127
    %v94 = vsel %vm93, %v86, %v90
    %v95 = vsel %vm93, %v88, %v92
    %v96 = vsel %vm93, %v90, %v86
    %v97 = vsel %vm93, %v92, %v88
    %v98 = vsel %vm34, 1, 0
    %v99 = vsel %vm35, 1, 0
    %vm100 = vcmp.eq.s32.totalorder %v98, 1
    %vm101 = vcmp.eq.s32.totalorder %v99, 1
    %v102 = vsel %vm100, -inf, %v94
    %v103 = vsel %vm101, -inf, %v96
    %v104 = vsel %vm100, -inf, %v95
    %v105 = vsel %vm101, -inf, %v97
    %v106 = vmax.f32 %v70, %v102
    %v107 = vmax.f32 %v71, %v103
    %v108 = vmax.f32 %v72, %v104
    %v109 = vmax.f32 %v73, %v105
    %v114 = vrot.slane %v107, 4
    %v115 = vrot.slane %v109, 4
    %vm116 = vcmask 1043456
    %v117 = vsel %vm116, %v106, %v114
    %v118 = vsel %vm116, %v108, %v115
    %v121 = vmax.f32 %v25, %v117
    %v122 = vmax.f32 %v26, %v118
    %125 = vst [vmem:[#allocation1] ss:$2 sm:$0xff] %v121
    %v126 = vld.sshfl [vmem:[#allocation1] sm:$0xff pattern:$0x75316420]
    %v127 = vld.sshfl [vmem:[#allocation1 + $0x8] sm:$0xff pattern:$0x75316420]
    %s128 = scalar_lea.vmem [#allocation1], 16
    %129 = vst [vmem:[%s128] ss:$2 sm:$0xff] %v122
    %v130 = vld.sshfl [vmem:[#allocation1 + $0x10] sm:$0xff pattern:$0x75316420]
    %v131 = vld.sshfl [vmem:[#allocation1 + $0x18] sm:$0xff pattern:$0x75316420]
    %136 = vrot.lane.b32.xlu0 %v126, 16
    %v137 = vpop.permute.xlu0 %136
    %138 = vrot.lane.b32.xlu0 %v130, 16
    %v139 = vpop.permute.xlu0 %138
    %140 = vrot.lane.b32.xlu0 %v127, 16
    %v141 = vpop.permute.xlu0 %140
    %142 = vrot.lane.b32.xlu0 %v131, 16
    %v143 = vpop.permute.xlu0 %142
    %v144 = vsel %vm36, %v137, %v141
    %v145 = vsel %vm36, %v139, %v143
    %v146 = vsel %vm36, %v141, %v137
    %v147 = vsel %vm36, %v143, %v139
    %v148 = vsel %vm36, 1, 0
    %v149 = vsel %vm37, 1, 0
    %vm150 = vcmp.eq.s32.totalorder %v148, 1
    %vm151 = vcmp.eq.s32.totalorder %v149, 1
    %v152 = vsel %vm150, -inf, %v146
    %v153 = vsel %vm151, -inf, %v144
    %v154 = vsel %vm150, -inf, %v147
    %v155 = vsel %vm151, -inf, %v145
    %156 = vst [vmem:[#allocation1] ss:$2 sm:$0xff] %v121
    %v157 = vld.sshfl [vmem:[#allocation1] sm:$0xff pattern:$0x75316420]
    %v158 = vld.sshfl [vmem:[#allocation1 + $0x8] sm:$0xff pattern:$0x75316420]
    %s159 = scalar_lea.vmem [#allocation1], 16
    %160 = vst [vmem:[%s159] ss:$2 sm:$0xff] %v122
    %v161 = vld.sshfl [vmem:[#allocation1 + $0x10] sm:$0xff pattern:$0x75316420]
    %v162 = vld.sshfl [vmem:[#allocation1 + $0x18] sm:$0xff pattern:$0x75316420]
    %167 = vrot.lane.b32.xlu0 %v157, 112
    %v168 = vpop.permute.xlu0 %167
    %169 = vrot.lane.b32.xlu0 %v161, 112
    %v170 = vpop.permute.xlu0 %169
    %171 = vrot.lane.b32.xlu0 %v158, 112
    %v172 = vpop.permute.xlu0 %171
    %173 = vrot.lane.b32.xlu0 %v162, 112
    %v174 = vpop.permute.xlu0 %173
    %vm175 = vcmp.lt.s32.totalorder %v28, 112
    %v176 = vsel %vm175, %v168, %v172
    %v177 = vsel %vm175, %v170, %v174
    %v178 = vsel %vm175, %v172, %v168
    %v179 = vsel %vm175, %v174, %v170
    %v180 = vsel %vm38, 1, 0
    %v181 = vsel %vm39, 1, 0
    %vm182 = vcmp.eq.s32.totalorder %v180, 1
    %vm183 = vcmp.eq.s32.totalorder %v181, 1
    %v184 = vsel %vm182, -inf, %v176
    %v185 = vsel %vm183, -inf, %v178
    %v186 = vsel %vm182, -inf, %v177
    %v187 = vsel %vm183, -inf, %v179
    %v188 = vmax.f32 %v152, %v184
    %v189 = vmax.f32 %v153, %v185
    %v190 = vmax.f32 %v154, %v186
    %v191 = vmax.f32 %v155, %v187
    %v196 = vrot.slane %v189, 4
    %v197 = vrot.slane %v191, 4
    %v198 = vsel %vm116, %v188, %v196
    %v199 = vsel %vm116, %v190, %v197
    %v202 = vmax.f32 %v121, %v198
    %v203 = vmax.f32 %v122, %v199
    %204 = vst [vmem:[#allocation5] sm:$0xff] %v202
    %205 = vst [vmem:[#allocation5 + $0x8] sm:$0xff] %v203
    %v206 = vld [vmem:[#allocation5] sm:$0xff]
    %v207 = vld [vmem:[#allocation5 + $0x8] sm:$0xff]
    %210 = vst [vmem:[#allocation1] ss:$2 sm:$0xff] %v206
    %v211 = vld.sshfl [vmem:[#allocation1] sm:$0xff pattern:$0x75316420]
    %v212 = vld.sshfl [vmem:[#allocation1 + $0x8] sm:$0xff pattern:$0x75316420]
    %s213 = scalar_lea.vmem [#allocation1], 16
    %214 = vst [vmem:[%s213] ss:$2 sm:$0xff] %v207
    %v215 = vld.sshfl [vmem:[#allocation1 + $0x10] sm:$0xff pattern:$0x75316420]
    %v216 = vld.sshfl [vmem:[#allocation1 + $0x18] sm:$0xff pattern:$0x75316420]
    %v221 = vsel %vm116, %v211, 0.0
    %v222 = vsel %vm116, %v212, 0.0
    %v223 = vadd.f32 %v221, %v222
    %v224 = vsel %vm116, %v215, 0.0
    %v225 = vadd.f32 %v223, %v224
    %v226 = vsel %vm116, %v216, 0.0
    %v227 = vadd.f32 %v225, %v226
    %228 = vadd.xlane.f32.xlu0 %v227
    %v229 = vpop.xlane.xlu0 %228
    %v230 = vrcp.pop 512.0
    %v231 = vmul.f32 512.0, %v230
    %v232 = vsub.f32 1.0, %v231
    %v233 = vmul.f32 %v230, %v232
    %v234 = vadd.f32 %v230, %v233
    %vm235 = vweird.f32 %v230
    %v236 = vsel %vm235, %v230, %v234
    %v237 = vmul.f32 %v229, %v236
    %v240 = vunpack.c.l.s4 839922192
    %v241 = vunpack.c.0.s8 %v240
    %v242 = vperm.slane %v237, %v241
    %v244 = vsub.f32 %v206, %v242
    %v245 = vsub.f32 %v207, %v242
    %v246 = vmul.f32 %v244, %v244
    %v247 = vmul.f32 %v245, %v245
    %250 = vst [vmem:[#allocation1] ss:$2 sm:$0xff] %v246
    %v251 = vld.sshfl [vmem:[#allocation1] sm:$0xff pattern:$0x75316420]
    %v252 = vld.sshfl [vmem:[#allocation1 + $0x8] sm:$0xff pattern:$0x75316420]
    %s253 = scalar_lea.vmem [#allocation1], 16
    %254 = vst [vmem:[%s253] ss:$2 sm:$0xff] %v247
    %v255 = vld.sshfl [vmem:[#allocation1 + $0x10] sm:$0xff pattern:$0x75316420]
    %v256 = vld.sshfl [vmem:[#allocation1 + $0x18] sm:$0xff pattern:$0x75316420]
    %v261 = vsel %vm116, %v251, 0.0
    %v262 = vsel %vm116, %v252, 0.0
    %v263 = vadd.f32 %v261, %v262
    %v264 = vsel %vm116, %v255, 0.0
    %v265 = vadd.f32 %v263, %v264
    %v266 = vsel %vm116, %v256, 0.0
    %v267 = vadd.f32 %v265, %v266
    %268 = vadd.xlane.f32.xlu0 %v267
    %v269 = vpop.xlane.xlu0 %268
    %v270 = vmul.f32 %v269, %v236
    %v271 = vadd.f32 %v270, 1e-05
    %v272 = vrsqrt.pop %v271
    %v273 = vmul.f32 %v272, %v271
    %v274 = vmul.f32 %v273, %v272
    %v275 = vmul.f32 0.5, %v274
    %v276 = vsub.f32 1.5, %v275
    %v277 = vmul.f32 %v272, %v276
    %vm278 = vweird.f32 %v271
    %vm279 = vweird.f32 %v272
    %vm280 = vmor %vm278, %vm279
    %v281 = vsel %vm280, %v272, %v277
    %v284 = vunpack.c.l.s4 839922192
    %v285 = vunpack.c.0.s8 %v284
    %v286 = vperm.slane %v281, %v285
    %v288 = vmul.f32 %v244, %v286
    %v289 = vmul.f32 %v245, %v286
    %290 = vst [vmem:[#allocation5] sm:$0xff] %v288
    %291 = vst [vmem:[#allocation5 + $0x8] sm:$0xff] %v289
    // Predicated region
    $region10: #{tpu_custom_call.1} parent=1 // pred_check
      _
    $region11: #{tpu_custom_call.1} parent=1 // pred_check_branch
      %293 = sbr.rel (0) target = $region13
    $region12: #{tpu_custom_call.1} parent=1 // pred_region
      %295 = vsyncadd [#allocation4], 0
      %s296 = sshll.u32 [#allocation5], 4
      %s297 = int_to_ptr.vmem [resolvable:$true] %s296
      %s298 = sshll.u32 %s1, 4
      %s299 = int_to_ptr.hbm [resolvable:$true] %s298
      %304 = dma.vmem_to_hbm [thread:$0]  %s297, 256, %s299, [#allocation4], 128, 128, 8
    $region13: #{tpu_custom_call.1} parent=1 // pred_fallthru
      _
    // Predicated region
    $region14: #{tpu_custom_call.1} parent=1 // pred_check
      _
    $region15: #{tpu_custom_call.1} parent=1 // pred_check_branch
      %306 = sbr.rel (0) target = $region17
    $region16: #{tpu_custom_call.1} parent=1 // pred_region
      %308 = dma.done [#allocation4], 256
    $region17: #{tpu_custom_call.1} parent=1 // pred_fallthru
      _
    %309 = vsyncpa [#allocation3], 1
    %310 = vsyncpa [#allocation4], 1

</llo_original>
